<compile_context>
chip_gen: v6e
topology: v6e:2x2x1
jax: 0.10.0
libtpu: 0.0.40
codegen_flags: <defaults>
</compile_context>

<pallas_src>
import functools

import jax
import jax.numpy as jnp
from jax import lax
from jax.experimental import pallas as pl
from jax.experimental.pallas import tpu as pltpu


_INV40 = 0.025  # 1/40 folded into a multiply (avoids a divide)


def _weight_from_pos(j, p0, p1):
    """w = 1 - rel/40 with rel = (p1 - j) if j < p1 else (j - p0)."""
    rel = jnp.where(j < p1, p1 - j, j - p0)
    return 1.0 - _INV40 * rel.astype(jnp.float32)


def _ape_kernel_rowmajor(pos_ref, x_ref, o_ref):
    # pos_ref: (B, 2) int32 in SMEM (scalar prefetch)
    # x_ref / o_ref: (TS, H) block (batch dim squeezed by the BlockSpec)
    b = pl.program_id(0)
    s = pl.program_id(1)
    ts = x_ref.shape[0]

    p0 = pos_ref[b, 0]
    p1 = pos_ref[b, 1]

    # Weight is constant across the hidden (lane) axis: compute a (TS, 1)
    # column only; the final multiply broadcasts over H.
    j = lax.broadcasted_iota(jnp.int32, (ts, 1), 0) + s * ts
    w = _weight_from_pos(j, p0, p1)                       # (TS, 1), f32

    x = x_ref[...]
    o_ref[...] = (x * w.astype(x.dtype)).astype(o_ref.dtype)


def _ape_kernel_lanepacked(pos_ref, x_ref, o_ref, *, shift, cols):
    # x reshaped in the wrapper to (B, rows, cols) with cols % 128 == 0;
    # each row covers r = cols >> shift consecutive sequence positions.
    b = pl.program_id(0)
    s = pl.program_id(1)
    trows = x_ref.shape[0]
    r = cols >> shift                                     # positions per row

    p0 = pos_ref[b, 0]
    p1 = pos_ref[b, 1]

    row = lax.broadcasted_iota(jnp.int32, (trows, 1), 0) + s * trows
    lane = lax.broadcasted_iota(jnp.int32, (1, cols), 1)
    j = row * r + (lane >> shift)                         # (trows, cols) seq pos
    w = _weight_from_pos(j, p0, p1)                       # (trows, cols), f32

    x = x_ref[...]
    o_ref[...] = (x * w.astype(x.dtype)).astype(o_ref.dtype)


def _choose_rows(total_rows, row_bytes, target_bytes):
    """Row-tile size whose block is ~target_bytes (multiple of 8 sublanes)."""
    t = max(8, target_bytes // max(1, row_bytes))
    if t >= total_rows:
        return total_rows                 # whole extent in one block
    return max(8, (t // 8) * 8)


def absolute_position_embedding(x, pos_inx, *, block_bytes=2 << 20):
    """x: (B, S, H) float array, pos_inx: (B, 2) int array."""
    B, S, H = x.shape
    pos_inx = pos_inx.astype(jnp.int32)
    itemsize = jnp.dtype(x.dtype).itemsize

    lane_packed = (H < 128) and (H & (H - 1) == 0) and ((S * H) % 128 == 0)

    if lane_packed:
        total = S * H
        cols = 128
        for c in (1024, 512, 256, 128):   # widest lane-dense row keeping >=8 rows
            if total % c == 0 and total // c >= 8:
                cols = c
                break
        rows = total // cols
        shift = H.bit_length() - 1        # log2(H)
        trows = _choose_rows(rows, cols * itemsize, block_bytes)
        x_in = x.reshape(B, rows, cols)   # contiguous -> free bitcast reshape
        kernel = functools.partial(_ape_kernel_lanepacked, shift=shift, cols=cols)
        blk = (pl.Squeezed(), trows, cols)
        grid = (B, pl.cdiv(rows, trows))
        out_struct = jax.ShapeDtypeStruct((B, rows, cols), x.dtype)
    else:
        trows = _choose_rows(S, H * itemsize, block_bytes)
        x_in = x
        kernel = _ape_kernel_rowmajor
        blk = (pl.Squeezed(), trows, H)
        grid = (B, pl.cdiv(S, trows))
        out_struct = jax.ShapeDtypeStruct((B, S, H), x.dtype)

    idx = lambda b, s, pos: (b, s, 0)     # prefetch ref passed positionally

    out = pl.pallas_call(
        kernel,
        out_shape=out_struct,
        grid_spec=pltpu.PrefetchScalarGridSpec(
            num_scalar_prefetch=1,        # pos_inx -> SMEM
            grid=grid,
            in_specs=[pl.BlockSpec(blk, idx)],
            out_specs=pl.BlockSpec(blk, idx),
        ),
        compiler_params=pltpu.CompilerParams(
            dimension_semantics=("parallel", "parallel"),
        ),
    )(pos_inx, x_in)

    return out.reshape(B, S, H)


def _reference(x, pos_inx):
    # pure-JAX reference mirroring the PyTorch loops
    B, S, H = x.shape
    j = jnp.arange(S)[None, :]                          # (1, S)
    p0 = pos_inx[:, 0][:, None]                         # (B, 1)
    p1 = pos_inx[:, 1][:, None]                         # (B, 1)
    rel = jnp.where(j < p1, p1 - j, j - p0)
    w = 1.0 - rel.astype(jnp.float32) / 40.0            # (B, S)
    return w[:, :, None] * x


if __name__ == "__main__":
    key = jax.random.PRNGKey(0)
    k1, k2, k3 = jax.random.split(key, 3)

    # 1) Small demo shape (batch, seq, hidden) -> lane-packed fast path.
    B, S, H = 2, 8, 32
    x = jax.random.normal(k1, (B, S, H), dtype=jnp.float32)
    pos_inx = jnp.array([[1, 3], [2, 5]], dtype=jnp.int32)
    out = jax.block_until_ready(absolute_position_embedding(x, pos_inx))
    ref = _reference(x, pos_inx)
    assert out.shape == (B, S, H)
    assert jnp.allclose(out, ref, atol=1e-5, rtol=1e-5)

    # 2) Larger shape exercising the natural path with a multi-step sequence
    #    grid (trows = 64 -> grid (2, 4)).
    B2, S2, H2 = 2, 256, 128
    x2 = jax.random.normal(k2, (B2, S2, H2), dtype=jnp.float32)
    pos_inx2 = jnp.array([[10, 20], [100, 130]], dtype=jnp.int32)
    out2 = jax.block_until_ready(
        absolute_position_embedding(x2, pos_inx2, block_bytes=64 * H2 * 4))
    ref2 = _reference(x2, pos_inx2)
    assert jnp.allclose(out2, ref2, atol=1e-5, rtol=1e-5)

    # 3) Awkward shape (S not multiple of 8, H not power of two / < 128):
    #    natural path, full-extent blocks.
    B3, S3, H3 = 2, 10, 48
    x3 = jax.random.normal(k3, (B3, S3, H3), dtype=jnp.float32)
    pos_inx3 = jnp.array([[2, 4], [5, 8]], dtype=jnp.int32)
    out3 = jax.block_until_ready(absolute_position_embedding(x3, pos_inx3))
    ref3 = _reference(x3, pos_inx3)
    assert jnp.allclose(out3, ref3, atol=1e-5, rtol=1e-5)

    print("KERNEL_OK")
</pallas_src>

<mosaic_0001>
module attributes {stable_mosaic.version = 11 : i64} {
  func.func @_ape_kernel_lanepacked(%arg0: i32, %arg1: i32, %arg2: memref<2x2xi32, #tpu.memory_space<smem>>, %arg3: memref<1x2x128xf32, #tpu.memory_space<vmem>>, %arg4: memref<1x2x128xf32, #tpu.memory_space<vmem>>) attributes {dimension_semantics = [#tpu.dimension_semantics<parallel>, #tpu.dimension_semantics<parallel>], iteration_bounds = array<i64: 2, 1>, scalar_prefetch = 1 : i64, scratch_operands = 0 : i64, tpu.core_type = #tpu.core_type<tc>, window_params = [{transform_indices = @transform_0, window_bounds = array<i64: 1, 2, 128>}, {transform_indices = @transform_1, window_bounds = array<i64: 1, 2, 128>}]} {
    %0 = arith.index_cast %arg0 : i32 to index
    %c0 = arith.constant 0 : index
    %1 = memref.load %arg2[%0, %c0] : memref<2x2xi32, #tpu.memory_space<smem>>
    %2 = arith.index_cast %arg0 : i32 to index
    %c1 = arith.constant 1 : index
    %3 = memref.load %arg2[%2, %c1] : memref<2x2xi32, #tpu.memory_space<smem>>
    %4 = tpu.iota {dimensions = array<i32: 0>} : vector<2x1xi32>
    %c2_i32 = arith.constant 2 : i32
    %5 = arith.muli %arg1, %c2_i32 : i32
    %6 = vector.broadcast %5 : i32 to vector<2x1xi32>
    %7 = arith.addi %4, %6 : vector<2x1xi32>
    %8 = tpu.iota {dimensions = array<i32: 1>} : vector<1x128xi32>
    %c4_i32 = arith.constant 4 : i32
    %9 = vector.broadcast %c4_i32 : i32 to vector<2x1xi32>
    %10 = arith.muli %7, %9 : vector<2x1xi32>
    %c5_i32 = arith.constant 5 : i32
    %11 = vector.broadcast %c5_i32 : i32 to vector<1x128xi32>
    %12 = arith.shrsi %8, %11 : vector<1x128xi32>
    %13 = vector.broadcast %10 : vector<2x1xi32> to vector<2x128xi32>
    %14 = vector.broadcast %12 : vector<1x128xi32> to vector<2x128xi32>
    %15 = arith.addi %13, %14 : vector<2x128xi32>
    %16 = vector.broadcast %3 : i32 to vector<2x128xi32>
    %17 = arith.cmpi slt, %15, %16 : vector<2x128xi32>
    %18 = vector.broadcast %3 : i32 to vector<2x128xi32>
    %19 = arith.subi %18, %15 : vector<2x128xi32>
    %20 = vector.broadcast %1 : i32 to vector<2x128xi32>
    %21 = arith.subi %15, %20 : vector<2x128xi32>
    %22 = arith.select %17, %19, %21 : vector<2x128xi1>, vector<2x128xi32>
    %23 = arith.sitofp %22 : vector<2x128xi32> to vector<2x128xf32>
    %cst = arith.constant 2.500000e-02 : f32
    %24 = vector.broadcast %cst : f32 to vector<2x128xf32>
    %25 = arith.mulf %24, %23 : vector<2x128xf32>
    %cst_0 = arith.constant 1.000000e+00 : f32
    %26 = vector.broadcast %cst_0 : f32 to vector<2x128xf32>
    %27 = arith.subf %26, %25 : vector<2x128xf32>
    %c0_1 = arith.constant 0 : index
    %c0_2 = arith.constant 0 : index
    %c0_3 = arith.constant 0 : index
    %28 = vector.load %arg3[%c0_1, %c0_2, %c0_3] : memref<1x2x128xf32, #tpu.memory_space<vmem>>, vector<1x2x128xf32>
    %29 = vector.shape_cast %28 : vector<1x2x128xf32> to vector<2x128xf32>
    %30 = arith.mulf %29, %27 : vector<2x128xf32>
    %c0_4 = arith.constant 0 : index
    %c0_5 = arith.constant 0 : index
    %c0_6 = arith.constant 0 : index
    %31 = vector.load %arg4[%c0_4, %c0_5, %c0_6] : memref<1x2x128xf32, #tpu.memory_space<vmem>>, vector<1x2x128xf32>
    %32 = vector.shape_cast %31 : vector<1x2x128xf32> to vector<2x128xf32>
    %33 = vector.shape_cast %30 : vector<2x128xf32> to vector<1x2x128xf32>
    tpu.vector_store %arg4[%c0_4, %c0_5, %c0_6], %33 {strides = array<i32>} : memref<1x2x128xf32, #tpu.memory_space<vmem>>, vector<1x2x128xf32>,
    return
  }
  func.func @transform_0(%arg0: i32, %arg1: i32, %arg2: memref<2x2xi32, #tpu.memory_space<smem>>) -> (i32, i32, i32) {
    %c0_i32 = arith.constant 0 : i32
    %c0_i32_0 = arith.constant 0 : i32
    return %arg0, %arg1, %c0_i32 : i32, i32, i32
  }
  func.func @transform_1(%arg0: i32, %arg1: i32, %arg2: memref<2x2xi32, #tpu.memory_space<smem>>) -> (i32, i32, i32) {
    %c0_i32 = arith.constant 0 : i32
    %c0_i32_0 = arith.constant 0 : i32
    return %arg0, %arg1, %c0_i32 : i32, i32, i32
  }
}

</mosaic_0001>

<llo_original>
// kernel: tpu_custom_call.1
$region0: #{tpu_custom_call.1}
  #allocation0 [shape = 'u32[]', space=smem, size = 0x4, offset = 0x4, fixed_abs, tag = 'smem constant byte address 0x4 - core index']
  #allocation1 [shape = 'u32[144,128]{1,0:T(1,128)}', space=vmem, size = 0x12000, scoped, tag = 'internal scratch']
  #allocation2 [shape = 's32[1]{0}', space=sflag, size = 0x4, scoped, tag = 'scoped memory for tpu_custom_call.1']
  #allocation3 [shape = 'u8[1024]{0}', space=smem, size = 0x400, scoped, tag = 'prefetched SMEM operand 0']
  %s0 = inlined_call_operand.hbm [shape: s32[2,2], index: 0, kind: input, shape index: {}]
  %s1 = inlined_call_operand.hbm [shape: f32[2,2,128], index: 1, kind: input, shape index: {}]
  %s2 = inlined_call_operand.hbm [shape: f32[2,2,128], index: 2, kind: output, shape index: {}]
  %s3 = sld [smem:[#allocation0]]
  $region41: #{tpu_custom_call.1} parent=0
    _
  %s5 = ssub.s32 1, %s3
  %s6 = scalar_select 0, %s5, %s3
  %8 = dma.hbm_to_smem %s0, 32, [#allocation3], [#allocation2]
  %9 = dma.done [#allocation2], 32
  %10 = sfence
  $region1: #{tpu_custom_call.1} parent=0
    #allocation4 [shape = 'u8[2048]{0}', space=vmem, size = 0x800, scoped, tag = 'input window, operand 1']
    #allocation5 [shape = 's32[2]{0}', space=sflag, size = 0x8, scoped, tag = 'scoped memory for tpu_custom_call.1']
    #allocation6 [shape = 's32[2]{0}', space=sflag, size = 0x8, scoped, tag = 'scoped memory for tpu_custom_call.1']
    #allocation7 [shape = 'u8[2048]{0}', space=vmem, size = 0x800, scoped, tag = 'output window, operand 0']
    %11 = vsyncpa [#allocation5], 0
    %s12 = scalar_lea.sflag [#allocation5], 1
    %13 = vsyncpa %s12, 0
    %14 = vsyncpa [#allocation6], 0
    %s15 = scalar_lea.sflag [#allocation6], 1
    %16 = vsyncpa %s15, 0
    loop: start=0, step=1, limit=4
    $region2: #{tpu_custom_call.1} parent=1 // loop_pre_header
      _
    $region3: #{tpu_custom_call.1} parent=1 // loop_header
      %s18 = sphi 0, %s22
      %p19 = scmp.ge.s32.totalorder %s18, 4
      %s25 = sphi 0, %s37
      %s26 = sphi 0, %s33
      %s27 = sphi 0, %s25
      %s28 = sphi 0, %s26
      %s29 = sphi 0, %s27
      %s30 = sphi 0, %s28
      %s42 = sphi 0, %s44
      %s45 = sphi 0, %s42
      %s46 = sphi 0, %s45
      %s62 = sphi 0, %s46
      %s70 = sphi 0, %s72
      %s73 = sphi 0, %s70
      %s74 = sphi 0, %s73
      %s90 = sphi 0, %s74
    $region4: #{tpu_custom_call.1} parent=1 // loop_header_branch
      %21 = sbr.rel (%p19) target = $region8
    $region5: #{tpu_custom_call.1} parent=1 // loop_body
      %s23 = ssub.s32 %s18, 1
      %s24 = ssub.s32 %s18, 2
      %s31 = sadd.s32 1, %s26
      %p32 = scmp.ge.s32.totalorder %s31, 1
      %s33 = scalar_select %p32, 0, %s31
      %s34 = sadd.s32 1, %s25
      %s35 = scalar_select %p32, %s34, %s25
      %p36 = scmp.ge.s32.totalorder %s35, 2
      %s37 = scalar_select %p36, 0, %s35
      %s38 = ssub.s32 %s25, %s37
      %s39 = ssub.s32 %s26, %s33
      %s40 = sor.u32 %s38, %s39
      %p41 = scmp.eq.s32.totalorder %s40, 0
      %s43 = sadd.s32 %s42, 1
      %s44 = scalar_select %p41, %s42, %s43
      %p47 = pneg %p41
      %p48 = scmp.eq.s32.totalorder %s18, 1
      %p49 = por %p47, %p48
      %p50 = scmp.ne.s32.totalorder %s42, %s45
      %p51 = scmp.eq.s32.totalorder %s18, 0
      %p52 = por %p50, %p51
      %p53 = scmp.ne.s32.totalorder %s42, %s45
      %p54 = scmp.eq.s32.totalorder %s23, 1
      %p55 = por %p53, %p54
      %p56 = scmp.ne.s32.totalorder %s45, %s46
      %p57 = scmp.eq.s32.totalorder %s23, 0
      %p58 = por %p56, %p57
      %p59 = scmp.ne.s32.totalorder %s45, %s46
      %p60 = scmp.eq.s32.totalorder %s24, 1
      %p61 = por %p59, %p60
      %p63 = scmp.ne.s32.totalorder %s46, %s62
      %p64 = scmp.eq.s32.totalorder %s24, 0
      %p65 = por %p63, %p64
      %s66 = ssub.s32 %s25, %s37
      %s67 = ssub.s32 %s26, %s33
      %s68 = sor.u32 %s66, %s67
      %p69 = scmp.eq.s32.totalorder %s68, 0
      %s71 = sadd.s32 %s70, 1
      %s72 = scalar_select %p69, %s70, %s71
      %p75 = pneg %p69
      %p76 = scmp.eq.s32.totalorder %s18, 1
      %p77 = por %p75, %p76
      %p78 = scmp.ne.s32.totalorder %s70, %s73
      %p79 = scmp.eq.s32.totalorder %s18, 0
      %p80 = por %p78, %p79
      %p81 = scmp.ne.s32.totalorder %s70, %s73
      %p82 = scmp.eq.s32.totalorder %s23, 1
      %p83 = por %p81, %p82
      %p84 = scmp.ne.s32.totalorder %s73, %s74
      %p85 = scmp.eq.s32.totalorder %s23, 0
      %p86 = por %p84, %p85
      %p87 = scmp.ne.s32.totalorder %s73, %s74
      %p88 = scmp.eq.s32.totalorder %s24, 1
      %p89 = por %p87, %p88
      %p91 = scmp.ne.s32.totalorder %s74, %s90
      %p92 = scmp.eq.s32.totalorder %s24, 0
      %p93 = por %p91, %p92
      %p94 = scmp.le.s32.totalorder 1, %s18
      %p95 = scmp.lt.s32.totalorder %s18, 3
      %p96 = pnand %p94, %p95
      %p97 = pneg %p96
      // Predicated region
      $region9: #{tpu_custom_call.1} parent=5 // pred_check
        _
      $region10: #{tpu_custom_call.1} parent=5 // pred_check_branch
        %99 = sbr.rel (%p96) target = $region12
      $region11: #{tpu_custom_call.1} parent=5 // pred_region
        %s100 = ssub.s32 %s18, 1
      $region12: #{tpu_custom_call.1} parent=5 // pred_fallthru
        _
      %p101 = scmp.lt.s32.totalorder %s18, 2
      // Predicated region
      $region13: #{tpu_custom_call.1} parent=5 // pred_check
        %p102 = pneg %p101
      $region14: #{tpu_custom_call.1} parent=5 // pred_check_branch
        %104 = sbr.rel (%p102) target = $region16
      $region15: #{tpu_custom_call.1} parent=5 // pred_region
        // Predicated region
        $region17: #{tpu_custom_call.1} parent=15 // pred_check
          %p105 = pneg %p52
        $region18: #{tpu_custom_call.1} parent=15 // pred_check_branch
          %107 = sbr.rel (%p105) target = $region20
        $region19: #{tpu_custom_call.1} parent=15 // pred_region
          %s108 = sand.u32 %s42, 1
          %s109 = scalar_lea.sflag [#allocation5], %s108
          %s110 = sand.u32 %s42, 1
          %s111 = smul.addr %s110, 2
          %s112 = scalar_lea.vmem [#allocation4], %s111
          %s114 = ssub.s32 32, 32
          %115 = vsyncadd %s109, %s114
          %s116 = sadd.s32 %s26, %s25
          %s117 = smul.addr %s116, 32
          %s118 = scalar_lea.hbm %s1, %s117
          %s120 = sshll.u32 %s112, 4
          %s121 = int_to_ptr.vmem [resolvable:$true] %s120
          %123 = dma.hbm_to_vmem [thread:$0]  %s118, 32, %s121, %s109
        $region20: #{tpu_custom_call.1} parent=15 // pred_fallthru
          _
      $region16: #{tpu_custom_call.1} parent=5 // pred_fallthru
        _
      %p124 = scmp.le.s32.totalorder 1, %s18
      %p125 = scmp.lt.s32.totalorder %s18, 3
      %p126 = pnand %p124, %p125
      %p127 = pneg %p126
      // Predicated region
      $region21: #{tpu_custom_call.1} parent=5 // pred_check
        _
      $region22: #{tpu_custom_call.1} parent=5 // pred_check_branch
        %129 = sbr.rel (%p126) target = $region24
      $region23: #{tpu_custom_call.1} parent=5 // pred_region
        %s130 = ssub.s32 %s18, 1
        %s131 = sand.u32 %s45, 1
        %s132 = scalar_lea.sflag [#allocation5], %s131
        %s133 = sand.u32 %s45, 1
        %s134 = smul.addr %s133, 2
        %s135 = scalar_lea.vmem [#allocation4], %s134
        // Predicated region
        $region25: #{tpu_custom_call.1} parent=23 // pred_check
          %p136 = pneg %p58
        $region26: #{tpu_custom_call.1} parent=23 // pred_check_branch
          %138 = sbr.rel (%p136) target = $region28
        $region27: #{tpu_custom_call.1} parent=23 // pred_region
          %139 = dma.done %s132, 32
        $region28: #{tpu_custom_call.1} parent=23 // pred_fallthru
          _
        %s140 = sand.u32 %s45, 1
        %s141 = scalar_lea.sflag [#allocation5], %s140
        %s142 = sand.u32 %s45, 1
        %s143 = smul.addr %s142, 2
        %s144 = scalar_lea.vmem [#allocation4], %s143
        %p145 = pneg %p58
        %p146 = pneg %p55
        %p147 = pneg %p86
        %p148 = pneg %p83
        %s149 = sand.u32 %s73, 1
        %s150 = scalar_lea.sflag [#allocation6], %s149
        %s151 = sand.u32 %s73, 1
        %s152 = smul.addr %s151, 2
        %s153 = scalar_lea.vmem [#allocation7], %s152
        %s154 = smul.u32 %s27, 128
        %s155 = sld [smem:[#allocation3 + %s154]]
        %s156 = sadd.s32 %s154, 1
        %s157 = sld [smem:[#allocation3 + %s156]]
        %v158 = vlaneseq
        %v159 = vshrl.u32 %v158, 7
        %s160 = smul.u32 %s28, 2
        %v161 = vstv %s160
        %v162 = vadd.s32 %v159, %v161
        %v163 = vlaneseq
        %v164 = vand.u32 %v163, 127
        %v165 = vmul.u32 %v162, 4
        %v166 = vshra.s32 %v164, 5
        %v167 = vadd.s32 %v165, %v166
        %v168 = vstv %s157
        %vm169 = vcmp.lt.s32.totalorder %v167, %v168
        %v170 = vsub.s32 %v168, %v167
        %v171 = vstv %s155
        %v172 = vsub.s32 %v167, %v171
        %v173 = vsel %vm169, %v170, %v172
        %v174 = vcvt.s32.f32 %v173
        %v175 = vmul.f32 %v174, 0.025
        %v176 = vsub.f32 1.0, %v175
        %v177 = vld [vmem:[%s135] sm:$0x3]
        %v178 = vmul.f32 %v177, %v176
        %179 = vst [vmem:[%s153] sm:$0x3] %v178
        %s180 = sand.u32 %s73, 1
        %s181 = scalar_lea.sflag [#allocation6], %s180
        %s182 = sand.u32 %s73, 1
        %s183 = smul.addr %s182, 2
        %s184 = scalar_lea.vmem [#allocation7], %s183
        // Predicated region
        $region29: #{tpu_custom_call.1} parent=23 // pred_check
          %p185 = pneg %p83
        $region30: #{tpu_custom_call.1} parent=23 // pred_check_branch
          %187 = sbr.rel (%p185) target = $region32
        $region31: #{tpu_custom_call.1} parent=23 // pred_region
          %s189 = ssub.s32 32, 32
          %190 = vsyncadd %s181, %s189
          %s191 = sadd.s32 %s28, %s27
          %s192 = smul.addr %s191, 32
          %s193 = scalar_lea.hbm %s2, %s192
          %s195 = sshll.u32 %s184, 4
          %s196 = int_to_ptr.vmem [resolvable:$true] %s195
          %198 = dma.vmem_to_hbm [thread:$0]  %s196, 32, %s193, %s181
        $region32: #{tpu_custom_call.1} parent=23 // pred_fallthru
          _
      $region24: #{tpu_custom_call.1} parent=5 // pred_fallthru
        _
      %p199 = scmp.le.s32.totalorder 2, %s18
      // Predicated region
      $region33: #{tpu_custom_call.1} parent=5 // pred_check
        %p200 = pneg %p199
      $region34: #{tpu_custom_call.1} parent=5 // pred_check_branch
        %202 = sbr.rel (%p200) target = $region36
      $region35: #{tpu_custom_call.1} parent=5 // pred_region
        %s203 = ssub.s32 %s18, 2
        // Predicated region
        $region37: #{tpu_custom_call.1} parent=35 // pred_check
          %p204 = pneg %p89
        $region38: #{tpu_custom_call.1} parent=35 // pred_check_branch
          %206 = sbr.rel (%p204) target = $region40
        $region39: #{tpu_custom_call.1} parent=35 // pred_region
          %s207 = sand.u32 %s74, 1
          %s208 = scalar_lea.sflag [#allocation6], %s207
          %s209 = sand.u32 %s74, 1
          %s210 = smul.addr %s209, 2
          %s211 = scalar_lea.vmem [#allocation7], %s210
          %212 = dma.done %s208, 32
        $region40: #{tpu_custom_call.1} parent=35 // pred_fallthru
          _
      $region36: #{tpu_custom_call.1} parent=5 // pred_fallthru
        _
    $region6: #{tpu_custom_call.1} parent=1 // loop_footer
      %s22 = sadd.s32 1, %s18
    $region7: #{tpu_custom_call.1} parent=1 // loop_footer_branch
      %17 = sbr.rel target = $region3
    $region8: #{tpu_custom_call.1} parent=1 // loop_exit
      _
    %213 = vsyncpa [#allocation5], 1
    %s214 = scalar_lea.sflag [#allocation5], 1
    %215 = vsyncpa %s214, 1
    %216 = vsyncpa [#allocation6], 1
    %s217 = scalar_lea.sflag [#allocation6], 1
    %218 = vsyncpa %s217, 1

</llo_original>
